<compile_context>
chip_gen: v5e
topology: v5e:2x2
jax: 0.10.0
libtpu: 0.0.40
codegen_flags: <defaults>
</compile_context>

<pallas_src>
import math

import jax
import jax.numpy as jnp
import numpy as np
from jax.experimental import pallas as pl
from jax.experimental.pallas import tpu as pltpu

# ----------------- small config -----------------
B = 2            # batch
S = 8            # seq_len
D = 32           # embed_dim
H = 4            # num_attention_heads
KV = 2           # num_key_value_groups
HD = D // H      # head_dim = 8
GROUP = H // KV  # query heads per kv head = 2
I = 64           # intermediate_dim
EPS = 1e-5
START_POS = 0    # TODO(synk): KV-cache in-place writeback (torch buffer mutation, start_pos>0)
                 # not modeled; would need input_output_aliases for the cache update.

R = B * S        # total rows = 16
KD = KV * HD     # kv projection width = 16
QKVW = D + 2 * KD   # fused q|k|v width = 64
GUW = 2 * I         # fused gate|up width = 128 (lane dense)
HALF = HD // 2      # rotate-half shift = 4


# ----------------- fused decoder-layer kernel (one grid step == one batch) -----------------
def _decoder_layer_kernel(x_ref, ln1_ref, ln2_ref,
                          wqkv_ref, wo_ref, wgu_ref, wd_ref,
                          cos_ref, sina_ref, sinb_ref,
                          o_ref):
    f32 = jnp.float32
    bf16 = jnp.bfloat16

    def rms(v, w):                                   # f32 rmsnorm (VPU + EUP rsqrt)
        ms = jnp.mean(v * v, axis=-1, keepdims=True)
        return v * jax.lax.rsqrt(ms + EPS) * w

    def mxu(a, b, trans_b=False):                    # bf16 operands, f32 accumulation on the MXU
        dn = (((1,), (1,)), ((), ())) if trans_b else (((1,), (0,)), ((), ()))
        return jax.lax.dot_general(a.astype(bf16), b.astype(bf16), dn,
                                   preferred_element_type=f32)

    x = x_ref[...].astype(f32)                       # (S, D) rows of this batch

    # ---- input_layernorm + fused q|k|v projection (1/sqrt(HD) pre-folded into the q columns)
    xn = rms(x, ln1_ref[...])
    qkv = mxu(xn, wqkv_ref[...])                     # (S, D + 2*KD)

    # ---- RoPE once on the fused slab (v columns are identity: cos=1 / sin=0 in the tables;
    #      rotate_half sign & head-boundary wrap are folded into sinA/sinB on the host)
    qkv = (qkv * cos_ref[...]
           + jnp.roll(qkv, QKVW - HALF, axis=1) * sina_ref[...]
           + jnp.roll(qkv, HALF, axis=1) * sinb_ref[...])

    q = qkv[:, :D]                                   # (S, D)   already scaled by 1/sqrt(HD)
    k = qkv[:, D:D + KD]                             # (S, KD)
    v = qkv[:, D + KD:]                              # (S, KD)  (never rotated)

    # ---- causal mask generated in-kernel (no DMA'd mask table); START_POS == 0
    row = jax.lax.broadcasted_iota(jnp.int32, (S, S), 0)
    col = jax.lax.broadcasted_iota(jnp.int32, (S, S), 1)
    maskadd = jnp.where(col <= row, 0.0, -1e9).astype(f32)

    # ---- per-(kv-group, head) attention with a PER-HEAD softmax max; GQA heads share their
    #      group's K/V slice directly (no materialized repeat_kv)
    attn_heads = []
    for g in range(KV):
        kh = k[:, g * HD:(g + 1) * HD].astype(bf16)          # (S, HD), shared by GROUP heads
        vh = v[:, g * HD:(g + 1) * HD].astype(bf16)
        for r in range(GROUP):
            h = g * GROUP + r
            qh = q[:, h * HD:(h + 1) * HD]                   # (S, HD)
            s = mxu(qh, kh, trans_b=True) + maskadd          # (S, S) f32
            m = jnp.max(s, axis=-1, keepdims=True)           # per-head max -> no cross-head underflow
            e = jnp.exp(s - m)
            denom = jnp.sum(e, axis=-1, keepdims=True)       # >= 1 (diagonal unmasked), no 1/0
            p = e * pl.reciprocal(denom, approx=True)        # EUP reciprocal
            attn_heads.append(mxu(p, vh))                    # (S, HD)
    attn = jnp.concatenate(attn_heads, axis=1)               # (S, D), head-major

    # ---- o_proj + residual
    x1 = x + mxu(attn, wo_ref[...])

    # ---- post_attention_layernorm + fused gate|up + SwiGLU + down_proj + residual
    xn2 = rms(x1, ln2_ref[...])
    gu = mxu(xn2, wgu_ref[...])                               # (S, 2*I) lane-dense
    gg = gu[:, :I]
    uu = gu[:, I:]
    hmid = (gg * jax.nn.sigmoid(gg)) * uu                     # silu(gate) * up, f32
    out = x1 + mxu(hmid, wd_ref[...])                         # (S, D)

    # NOTE: the (S, 32) store is a sub-128-lane masked vst; at production D present a
    # lane-dense (rows, 128k) output slab via the wrapper/out_spec.
    o_ref[...] = out.astype(o_ref.dtype)


def decoder_layer(x, params, tables):
    """Fused Llama decoder layer. x: (B, S, D) -> (B, S, D)."""
    x2d = x.reshape(R, D)
    row_spec = pl.BlockSpec((S, D), lambda b: (b, 0))         # one batch of rows per grid step

    def const_spec(a):                                        # weights / tables: fetched once
        return pl.BlockSpec(a.shape, lambda b: (0, 0))

    inputs = (x2d, params["ln1_w"], params["ln2_w"],
              params["wqkv"], params["wo"], params["wgu"], params["wd"],
              tables["cos"], tables["sina"], tables["sinb"])
    in_specs = [row_spec] + [const_spec(a) for a in inputs[1:]]

    out = pl.pallas_call(
        _decoder_layer_kernel,
        out_shape=jax.ShapeDtypeStruct((R, D), x.dtype),
        grid=(B,),
        in_specs=in_specs,
        out_specs=row_spec,
        compiler_params=pltpu.CompilerParams(
            dimension_semantics=("parallel",)),               # v7x: 2 TCs split the batches
    )(*inputs)
    return out.reshape(B, S, D)


# ----------------- host-side constant tables & fused weights -----------------
def build_tables(cos_hd, sin_hd):
    """Folded RoPE tables for the fused q|k|v slab, all precomputed on the host."""
    cos_hd = np.asarray(cos_hd, dtype=np.float32)     # (S, HD)
    sin_hd = np.asarray(sin_hd, dtype=np.float32)
    lane = np.arange(HD)
    # rotate_half(x)*sin == roll(x, -HALF)*sinA + roll(x, +HALF)*sinB  (per head of width HD)
    sina_hd = np.where(lane[None, :] < HALF, -sin_hd, 0.0)    # multiplies x[j + HALF]
    sinb_hd = np.where(lane[None, :] >= HALF, sin_hd, 0.0)    # multiplies x[j - HALF]

    def seg(t_head, v_fill):
        # q columns: H head copies | k columns: KV head copies | v columns: identity fill
        return np.concatenate(
            [np.tile(t_head, (1, H)), np.tile(t_head, (1, KV)),
             np.full((S, KD), v_fill, dtype=np.float32)], axis=1).astype(np.float32)

    return {"cos": jnp.asarray(seg(cos_hd, 1.0)),
            "sina": jnp.asarray(seg(sina_hd, 0.0)),
            "sinb": jnp.asarray(seg(sinb_hd, 0.0))}


def build_kernel_params(p):
    """Fuse q|k|v and gate|up, fold the score scale into wq, store weights as bf16."""
    scale = 1.0 / math.sqrt(HD)
    wqkv = jnp.concatenate([p["wq"] * scale, p["wk"], p["wv"]], axis=1).astype(jnp.bfloat16)
    wgu = jnp.concatenate([p["wg"], p["wu"]], axis=1).astype(jnp.bfloat16)
    return {"wqkv": wqkv,
            "wo": p["wo"].astype(jnp.bfloat16),
            "wgu": wgu,
            "wd": p["wd"].astype(jnp.bfloat16),
            "ln1_w": p["ln1_w"], "ln2_w": p["ln2_w"]}


# ----------------- pure-JAX reference (mirrors PyTorch semantics) -----------------
def _ref_rotate_half(x):
    x1 = x[..., : x.shape[-1] // 2]
    x2 = x[..., x.shape[-1] // 2:]
    return jnp.concatenate((-x2, x1), axis=-1)


def ref_decoder_layer(x, cos, sin, mask, params):
    def rms(v, w):
        ms = jnp.mean(v.astype(jnp.float32) ** 2, axis=-1, keepdims=True)
        return v * jax.lax.rsqrt(ms + EPS) * w.reshape(-1)

    residual = x
    xn = rms(x, params["ln1_w"])
    q = (xn @ params["wq"]).reshape(B, S, H, HD).transpose(0, 2, 1, 3)     # (B,H,S,HD)
    k = (xn @ params["wk"]).reshape(B, S, KV, HD).transpose(0, 2, 1, 3)    # (B,KV,S,HD)
    v = (xn @ params["wv"]).reshape(B, S, KV, HD).transpose(0, 2, 1, 3)
    c = cos[:, None]; s = sin[:, None]
    q = q * c + _ref_rotate_half(q) * s
    k = k * c + _ref_rotate_half(k) * s
    k = jnp.repeat(k, GROUP, axis=1)                                       # repeat_kv
    v = jnp.repeat(v, GROUP, axis=1)
    scores = jnp.einsum("bhqd,bhkd->bhqk", q, k) / math.sqrt(HD) + mask
    probs = jax.nn.softmax(scores.astype(jnp.float32), axis=-1)
    attn = jnp.einsum("bhqk,bhkd->bhqd", probs, v)
    attn = attn.transpose(0, 2, 1, 3).reshape(B, S, D) @ params["wo"]
    x = residual + attn
    residual = x
    xn = rms(x, params["ln2_w"])
    g = xn @ params["wg"]; u = xn @ params["wu"]
    x = residual + ((g * jax.nn.sigmoid(g)) * u) @ params["wd"]
    return x


# ----------------- main -----------------
if __name__ == "__main__":
    key = jax.random.PRNGKey(0)
    keys = jax.random.split(key, 10)

    def w(k, shape):
        return 0.02 * jax.random.normal(k, shape, dtype=jnp.float32)

    ref_params = {
        "wq": w(keys[0], (D, D)),
        "wk": w(keys[1], (D, KD)),
        "wv": w(keys[2], (D, KD)),
        "wo": w(keys[3], (D, D)),
        "wg": w(keys[4], (D, I)),
        "wu": w(keys[5], (D, I)),
        "wd": w(keys[6], (I, D)),
        "ln1_w": jnp.ones((1, D), dtype=jnp.float32),   # RMSNorm weights init to ones
        "ln2_w": jnp.ones((1, D), dtype=jnp.float32),
    }

    x = jax.random.normal(keys[7], (B, S, D), dtype=jnp.float32)

    # RoPE cos/sin (pos_emb input of the module)
    positions = jnp.arange(START_POS, START_POS + S, dtype=jnp.float32)
    inv_freq = 1.0 / (500000.0 ** (jnp.arange(0, HD, 2, dtype=jnp.float32) / HD))
    angles = positions[:, None] * inv_freq[None, :]                 # (S, HD/2)
    angles = jnp.concatenate([angles, angles], axis=-1)             # (S, HD)
    cos_hd = jnp.cos(angles)
    sin_hd = jnp.sin(angles)
    cos = jnp.broadcast_to(cos_hd, (B, S, HD)).astype(jnp.float32)  # reference-style pos_emb
    sin = jnp.broadcast_to(sin_hd, (B, S, HD)).astype(jnp.float32)

    # causal additive mask (S, S) for the reference
    row = jnp.arange(S)[:, None]
    col = jnp.arange(S)[None, :]
    mask = jnp.where(col <= row, 0.0, -1e9).astype(jnp.float32)

    tables = build_tables(cos_hd, sin_hd)
    kparams = build_kernel_params(ref_params)

    out = jax.block_until_ready(decoder_layer(x, kparams, tables))
    ref = jax.block_until_ready(ref_decoder_layer(x, cos, sin, mask, ref_params))
    np.testing.assert_allclose(np.asarray(out), np.asarray(ref), rtol=1e-2, atol=1e-2)

    print("KERNEL_OK")
</pallas_src>

<mosaic_0001>
module attributes {stable_mosaic.version = 11 : i64} {
  func.func @_decoder_layer_kernel(%arg0: i32, %arg1: memref<8x32xf32, #tpu.memory_space<vmem>>, %arg2: memref<1x32xf32, #tpu.memory_space<vmem>>, %arg3: memref<1x32xf32, #tpu.memory_space<vmem>>, %arg4: memref<32x64xbf16, #tpu.memory_space<vmem>>, %arg5: memref<32x32xbf16, #tpu.memory_space<vmem>>, %arg6: memref<32x128xbf16, #tpu.memory_space<vmem>>, %arg7: memref<64x32xbf16, #tpu.memory_space<vmem>>, %arg8: memref<8x64xf32, #tpu.memory_space<vmem>>, %arg9: memref<8x64xf32, #tpu.memory_space<vmem>>, %arg10: memref<8x64xf32, #tpu.memory_space<vmem>>, %arg11: memref<8x32xf32, #tpu.memory_space<vmem>>) attributes {dimension_semantics = [#tpu.dimension_semantics<parallel>], iteration_bounds = array<i64: 2>, scalar_prefetch = 0 : i64, scratch_operands = 0 : i64, tpu.core_type = #tpu.core_type<tc>, window_params = [{transform_indices = @transform_0, window_bounds = array<i64: 8, 32>}, {pipeline_mode = #tpu.pipeline_mode<synchronous>, transform_indices = @transform_1, window_bounds = array<i64: 1, 32>}, {pipeline_mode = #tpu.pipeline_mode<synchronous>, transform_indices = @transform_2, window_bounds = array<i64: 1, 32>}, {pipeline_mode = #tpu.pipeline_mode<synchronous>, transform_indices = @transform_3, window_bounds = array<i64: 32, 64>}, {pipeline_mode = #tpu.pipeline_mode<synchronous>, transform_indices = @transform_4, window_bounds = array<i64: 32, 32>}, {pipeline_mode = #tpu.pipeline_mode<synchronous>, transform_indices = @transform_5, window_bounds = array<i64: 32, 128>}, {pipeline_mode = #tpu.pipeline_mode<synchronous>, transform_indices = @transform_6, window_bounds = array<i64: 64, 32>}, {pipeline_mode = #tpu.pipeline_mode<synchronous>, transform_indices = @transform_7, window_bounds = array<i64: 8, 64>}, {pipeline_mode = #tpu.pipeline_mode<synchronous>, transform_indices = @transform_8, window_bounds = array<i64: 8, 64>}, {pipeline_mode = #tpu.pipeline_mode<synchronous>, transform_indices = @transform_9, window_bounds = array<i64: 8, 64>}, {transform_indices = @transform_10, window_bounds = array<i64: 8, 32>}]} {
    %c0 = arith.constant 0 : index
    %c0_0 = arith.constant 0 : index
    %0 = vector.load %arg1[%c0, %c0_0] : memref<8x32xf32, #tpu.memory_space<vmem>>, vector<8x32xf32>
    %c0_1 = arith.constant 0 : index
    %c0_2 = arith.constant 0 : index
    %1 = vector.load %arg2[%c0_1, %c0_2] : memref<1x32xf32, #tpu.memory_space<vmem>>, vector<1x32xf32>
    %2 = arith.mulf %0, %0 : vector<8x32xf32>
    %cst = arith.constant dense<0.000000e+00> : vector<8xf32>
    %3 = vector.multi_reduction <add>, %2, %cst [1] : vector<8x32xf32> to vector<8xf32>
    %4 = vector.shape_cast %3 : vector<8xf32> to vector<8x1xf32>
    %cst_3 = arith.constant 3.200000e+01 : f32
    %5 = vector.broadcast %cst_3 : f32 to vector<8x1xf32>
    %6 = arith.divf %4, %5 : vector<8x1xf32>
    %cst_4 = arith.constant 9.99999974E-6 : f32
    %7 = vector.broadcast %cst_4 : f32 to vector<8x1xf32>
    %8 = arith.addf %6, %7 : vector<8x1xf32>
    %9 = math.rsqrt %8 : vector<8x1xf32>
    %10 = vector.broadcast %9 : vector<8x1xf32> to vector<8x32xf32>
    %11 = arith.mulf %0, %10 : vector<8x32xf32>
    %12 = vector.broadcast %1 : vector<1x32xf32> to vector<8x32xf32>
    %13 = arith.mulf %11, %12 : vector<8x32xf32>
    %c0_5 = arith.constant 0 : index
    %c0_6 = arith.constant 0 : index
    %14 = vector.load %arg4[%c0_5, %c0_6] : memref<32x64xbf16, #tpu.memory_space<vmem>>, vector<32x64xbf16>
    %15 = arith.truncf %13 : vector<8x32xf32> to vector<8x32xbf16>
    %cst_7 = arith.constant dense<0.000000e+00> : vector<8x64xf32>
    %16 = tpu.matmul %15, %14, %cst_7 {dimension_numbers = #tpu.dot_dimension_numbers<[1], [0], [0], [1], [0, 0, 1, 1], [], []>} : vector<8x32xbf16>, vector<32x64xbf16>, vector<8x64xf32> -> vector<8x64xf32>
    %c0_8 = arith.constant 0 : index
    %c0_9 = arith.constant 0 : index
    %17 = vector.load %arg8[%c0_8, %c0_9] : memref<8x64xf32, #tpu.memory_space<vmem>>, vector<8x64xf32>
    %18 = arith.mulf %16, %17 : vector<8x64xf32>
    %19 = vector.extract_strided_slice %16 {offsets = [0, 4], sizes = [8, 60], strides = [1, 1]} : vector<8x64xf32> to vector<8x60xf32>
    %20 = vector.extract_strided_slice %16 {offsets = [0, 0], sizes = [8, 4], strides = [1, 1]} : vector<8x64xf32> to vector<8x4xf32>
    %21 = tpu.concatenate %19, %20 in 1 : vector<8x60xf32>, vector<8x4xf32> -> vector<8x64xf32>
    %c0_10 = arith.constant 0 : index
    %c0_11 = arith.constant 0 : index
    %22 = vector.load %arg9[%c0_10, %c0_11] : memref<8x64xf32, #tpu.memory_space<vmem>>, vector<8x64xf32>
    %23 = arith.mulf %21, %22 : vector<8x64xf32>
    %24 = arith.addf %18, %23 : vector<8x64xf32>
    %25 = vector.extract_strided_slice %16 {offsets = [0, 60], sizes = [8, 4], strides = [1, 1]} : vector<8x64xf32> to vector<8x4xf32>
    %26 = vector.extract_strided_slice %16 {offsets = [0, 0], sizes = [8, 60], strides = [1, 1]} : vector<8x64xf32> to vector<8x60xf32>
    %27 = tpu.concatenate %25, %26 in 1 : vector<8x4xf32>, vector<8x60xf32> -> vector<8x64xf32>
    %c0_12 = arith.constant 0 : index
    %c0_13 = arith.constant 0 : index
    %28 = vector.load %arg10[%c0_12, %c0_13] : memref<8x64xf32, #tpu.memory_space<vmem>>, vector<8x64xf32>
    %29 = arith.mulf %27, %28 : vector<8x64xf32>
    %30 = arith.addf %24, %29 : vector<8x64xf32>
    %31 = vector.extract_strided_slice %30 {offsets = [0, 0], sizes = [8, 32], strides = [1, 1]} : vector<8x64xf32> to vector<8x32xf32>
    %32 = vector.extract_strided_slice %30 {offsets = [0, 32], sizes = [8, 16], strides = [1, 1]} : vector<8x64xf32> to vector<8x16xf32>
    %33 = vector.extract_strided_slice %30 {offsets = [0, 48], sizes = [8, 16], strides = [1, 1]} : vector<8x64xf32> to vector<8x16xf32>
    %34 = tpu.iota {dimensions = array<i32: 0>} : vector<8x8xi32>
    %35 = tpu.iota {dimensions = array<i32: 1>} : vector<8x8xi32>
    %36 = arith.cmpi sle, %35, %34 : vector<8x8xi32>
    %cst_14 = arith.constant 0.000000e+00 : f32
    %cst_15 = arith.constant -1.000000e+09 : f32
    %37 = vector.broadcast %cst_14 : f32 to vector<8x8xf32>
    %38 = vector.broadcast %cst_15 : f32 to vector<8x8xf32>
    %39 = arith.select %36, %37, %38 : vector<8x8xi1>, vector<8x8xf32>
    %40 = vector.extract_strided_slice %32 {offsets = [0, 0], sizes = [8, 8], strides = [1, 1]} : vector<8x16xf32> to vector<8x8xf32>
    %41 = arith.truncf %40 : vector<8x8xf32> to vector<8x8xbf16>
    %42 = vector.extract_strided_slice %33 {offsets = [0, 0], sizes = [8, 8], strides = [1, 1]} : vector<8x16xf32> to vector<8x8xf32>
    %43 = arith.truncf %42 : vector<8x8xf32> to vector<8x8xbf16>
    %44 = vector.extract_strided_slice %31 {offsets = [0, 0], sizes = [8, 8], strides = [1, 1]} : vector<8x32xf32> to vector<8x8xf32>
    %45 = arith.truncf %44 : vector<8x8xf32> to vector<8x8xbf16>
    %cst_16 = arith.constant dense<0.000000e+00> : vector<8x8xf32>
    %46 = tpu.matmul %45, %41, %cst_16 {dimension_numbers = #tpu.dot_dimension_numbers<[1], [1], [0], [0], [0, 0, 1, 0], [], []>} : vector<8x8xbf16>, vector<8x8xbf16>, vector<8x8xf32> -> vector<8x8xf32>
    %47 = arith.addf %46, %39 : vector<8x8xf32>
    %cst_17 = arith.constant dense<0xFF800000> : vector<8xf32>
    %48 = vector.multi_reduction <maximumf>, %47, %cst_17 [1] : vector<8x8xf32> to vector<8xf32>
    %49 = vector.shape_cast %48 : vector<8xf32> to vector<8x1xf32>
    %50 = vector.broadcast %49 : vector<8x1xf32> to vector<8x8xf32>
    %51 = arith.subf %47, %50 : vector<8x8xf32>
    %52 = math.exp %51 : vector<8x8xf32>
    %cst_18 = arith.constant dense<0.000000e+00> : vector<8xf32>
    %53 = vector.multi_reduction <add>, %52, %cst_18 [1] : vector<8x8xf32> to vector<8xf32>
    %54 = vector.shape_cast %53 : vector<8xf32> to vector<8x1xf32>
    %55 = tpu.reciprocal %54 {approx = true} : vector<8x1xf32> -> vector<8x1xf32>
    %56 = vector.broadcast %55 : vector<8x1xf32> to vector<8x8xf32>
    %57 = arith.mulf %52, %56 : vector<8x8xf32>
    %58 = arith.truncf %57 : vector<8x8xf32> to vector<8x8xbf16>
    %cst_19 = arith.constant dense<0.000000e+00> : vector<8x8xf32>
    %59 = tpu.matmul %58, %43, %cst_19 {dimension_numbers = #tpu.dot_dimension_numbers<[1], [0], [0], [1], [0, 0, 1, 1], [], []>} : vector<8x8xbf16>, vector<8x8xbf16>, vector<8x8xf32> -> vector<8x8xf32>
    %60 = vector.extract_strided_slice %31 {offsets = [0, 8], sizes = [8, 8], strides = [1, 1]} : vector<8x32xf32> to vector<8x8xf32>
    %61 = arith.truncf %60 : vector<8x8xf32> to vector<8x8xbf16>
    %cst_20 = arith.constant dense<0.000000e+00> : vector<8x8xf32>
    %62 = tpu.matmul %61, %41, %cst_20 {dimension_numbers = #tpu.dot_dimension_numbers<[1], [1], [0], [0], [0, 0, 1, 0], [], []>} : vector<8x8xbf16>, vector<8x8xbf16>, vector<8x8xf32> -> vector<8x8xf32>
    %63 = arith.addf %62, %39 : vector<8x8xf32>
    %cst_21 = arith.constant dense<0xFF800000> : vector<8xf32>
    %64 = vector.multi_reduction <maximumf>, %63, %cst_21 [1] : vector<8x8xf32> to vector<8xf32>
    %65 = vector.shape_cast %64 : vector<8xf32> to vector<8x1xf32>
    %66 = vector.broadcast %65 : vector<8x1xf32> to vector<8x8xf32>
    %67 = arith.subf %63, %66 : vector<8x8xf32>
    %68 = math.exp %67 : vector<8x8xf32>
    %cst_22 = arith.constant dense<0.000000e+00> : vector<8xf32>
    %69 = vector.multi_reduction <add>, %68, %cst_22 [1] : vector<8x8xf32> to vector<8xf32>
    %70 = vector.shape_cast %69 : vector<8xf32> to vector<8x1xf32>
    %71 = tpu.reciprocal %70 {approx = true} : vector<8x1xf32> -> vector<8x1xf32>
    %72 = vector.broadcast %71 : vector<8x1xf32> to vector<8x8xf32>
    %73 = arith.mulf %68, %72 : vector<8x8xf32>
    %74 = arith.truncf %73 : vector<8x8xf32> to vector<8x8xbf16>
    %cst_23 = arith.constant dense<0.000000e+00> : vector<8x8xf32>
    %75 = tpu.matmul %74, %43, %cst_23 {dimension_numbers = #tpu.dot_dimension_numbers<[1], [0], [0], [1], [0, 0, 1, 1], [], []>} : vector<8x8xbf16>, vector<8x8xbf16>, vector<8x8xf32> -> vector<8x8xf32>
    %76 = vector.extract_strided_slice %32 {offsets = [0, 8], sizes = [8, 8], strides = [1, 1]} : vector<8x16xf32> to vector<8x8xf32>
    %77 = arith.truncf %76 : vector<8x8xf32> to vector<8x8xbf16>
    %78 = vector.extract_strided_slice %33 {offsets = [0, 8], sizes = [8, 8], strides = [1, 1]} : vector<8x16xf32> to vector<8x8xf32>
    %79 = arith.truncf %78 : vector<8x8xf32> to vector<8x8xbf16>
    %80 = vector.extract_strided_slice %31 {offsets = [0, 16], sizes = [8, 8], strides = [1, 1]} : vector<8x32xf32> to vector<8x8xf32>
    %81 = arith.truncf %80 : vector<8x8xf32> to vector<8x8xbf16>
    %cst_24 = arith.constant dense<0.000000e+00> : vector<8x8xf32>
    %82 = tpu.matmul %81, %77, %cst_24 {dimension_numbers = #tpu.dot_dimension_numbers<[1], [1], [0], [0], [0, 0, 1, 0], [], []>} : vector<8x8xbf16>, vector<8x8xbf16>, vector<8x8xf32> -> vector<8x8xf32>
    %83 = arith.addf %82, %39 : vector<8x8xf32>
    %cst_25 = arith.constant dense<0xFF800000> : vector<8xf32>
    %84 = vector.multi_reduction <maximumf>, %83, %cst_25 [1] : vector<8x8xf32> to vector<8xf32>
    %85 = vector.shape_cast %84 : vector<8xf32> to vector<8x1xf32>
    %86 = vector.broadcast %85 : vector<8x1xf32> to vector<8x8xf32>
    %87 = arith.subf %83, %86 : vector<8x8xf32>
    %88 = math.exp %87 : vector<8x8xf32>
    %cst_26 = arith.constant dense<0.000000e+00> : vector<8xf32>
    %89 = vector.multi_reduction <add>, %88, %cst_26 [1] : vector<8x8xf32> to vector<8xf32>
    %90 = vector.shape_cast %89 : vector<8xf32> to vector<8x1xf32>
    %91 = tpu.reciprocal %90 {approx = true} : vector<8x1xf32> -> vector<8x1xf32>
    %92 = vector.broadcast %91 : vector<8x1xf32> to vector<8x8xf32>
    %93 = arith.mulf %88, %92 : vector<8x8xf32>
    %94 = arith.truncf %93 : vector<8x8xf32> to vector<8x8xbf16>
    %cst_27 = arith.constant dense<0.000000e+00> : vector<8x8xf32>
    %95 = tpu.matmul %94, %79, %cst_27 {dimension_numbers = #tpu.dot_dimension_numbers<[1], [0], [0], [1], [0, 0, 1, 1], [], []>} : vector<8x8xbf16>, vector<8x8xbf16>, vector<8x8xf32> -> vector<8x8xf32>
    %96 = vector.extract_strided_slice %31 {offsets = [0, 24], sizes = [8, 8], strides = [1, 1]} : vector<8x32xf32> to vector<8x8xf32>
    %97 = arith.truncf %96 : vector<8x8xf32> to vector<8x8xbf16>
    %cst_28 = arith.constant dense<0.000000e+00> : vector<8x8xf32>
    %98 = tpu.matmul %97, %77, %cst_28 {dimension_numbers = #tpu.dot_dimension_numbers<[1], [1], [0], [0], [0, 0, 1, 0], [], []>} : vector<8x8xbf16>, vector<8x8xbf16>, vector<8x8xf32> -> vector<8x8xf32>
    %99 = arith.addf %98, %39 : vector<8x8xf32>
    %cst_29 = arith.constant dense<0xFF800000> : vector<8xf32>
    %100 = vector.multi_reduction <maximumf>, %99, %cst_29 [1] : vector<8x8xf32> to vector<8xf32>
    %101 = vector.shape_cast %100 : vector<8xf32> to vector<8x1xf32>
    %102 = vector.broadcast %101 : vector<8x1xf32> to vector<8x8xf32>
    %103 = arith.subf %99, %102 : vector<8x8xf32>
    %104 = math.exp %103 : vector<8x8xf32>
    %cst_30 = arith.constant dense<0.000000e+00> : vector<8xf32>
    %105 = vector.multi_reduction <add>, %104, %cst_30 [1] : vector<8x8xf32> to vector<8xf32>
    %106 = vector.shape_cast %105 : vector<8xf32> to vector<8x1xf32>
    %107 = tpu.reciprocal %106 {approx = true} : vector<8x1xf32> -> vector<8x1xf32>
    %108 = vector.broadcast %107 : vector<8x1xf32> to vector<8x8xf32>
    %109 = arith.mulf %104, %108 : vector<8x8xf32>
    %110 = arith.truncf %109 : vector<8x8xf32> to vector<8x8xbf16>
    %cst_31 = arith.constant dense<0.000000e+00> : vector<8x8xf32>
    %111 = tpu.matmul %110, %79, %cst_31 {dimension_numbers = #tpu.dot_dimension_numbers<[1], [0], [0], [1], [0, 0, 1, 1], [], []>} : vector<8x8xbf16>, vector<8x8xbf16>, vector<8x8xf32> -> vector<8x8xf32>
    %112 = tpu.concatenate %59, %75, %95, %111 in 1 : vector<8x8xf32>, vector<8x8xf32>, vector<8x8xf32>, vector<8x8xf32> -> vector<8x32xf32>
    %c0_32 = arith.constant 0 : index
    %c0_33 = arith.constant 0 : index
    %113 = vector.load %arg5[%c0_32, %c0_33] : memref<32x32xbf16, #tpu.memory_space<vmem>>, vector<32x32xbf16>
    %114 = arith.truncf %112 : vector<8x32xf32> to vector<8x32xbf16>
    %cst_34 = arith.constant dense<0.000000e+00> : vector<8x32xf32>
    %115 = tpu.matmul %114, %113, %cst_34 {dimension_numbers = #tpu.dot_dimension_numbers<[1], [0], [0], [1], [0, 0, 1, 1], [], []>} : vector<8x32xbf16>, vector<32x32xbf16>, vector<8x32xf32> -> vector<8x32xf32>
    %116 = arith.addf %0, %115 : vector<8x32xf32>
    %c0_35 = arith.constant 0 : index
    %c0_36 = arith.constant 0 : index
    %117 = vector.load %arg3[%c0_35, %c0_36] : memref<1x32xf32, #tpu.memory_space<vmem>>, vector<1x32xf32>
    %118 = arith.mulf %116, %116 : vector<8x32xf32>
    %cst_37 = arith.constant dense<0.000000e+00> : vector<8xf32>
    %119 = vector.multi_reduction <add>, %118, %cst_37 [1] : vector<8x32xf32> to vector<8xf32>
    %120 = vector.shape_cast %119 : vector<8xf32> to vector<8x1xf32>
    %cst_38 = arith.constant 3.200000e+01 : f32
    %121 = vector.broadcast %cst_38 : f32 to vector<8x1xf32>
    %122 = arith.divf %120, %121 : vector<8x1xf32>
    %cst_39 = arith.constant 9.99999974E-6 : f32
    %123 = vector.broadcast %cst_39 : f32 to vector<8x1xf32>
    %124 = arith.addf %122, %123 : vector<8x1xf32>
    %125 = math.rsqrt %124 : vector<8x1xf32>
    %126 = vector.broadcast %125 : vector<8x1xf32> to vector<8x32xf32>
    %127 = arith.mulf %116, %126 : vector<8x32xf32>
    %128 = vector.broadcast %117 : vector<1x32xf32> to vector<8x32xf32>
    %129 = arith.mulf %127, %128 : vector<8x32xf32>
    %c0_40 = arith.constant 0 : index
    %c0_41 = arith.constant 0 : index
    %130 = vector.load %arg6[%c0_40, %c0_41] : memref<32x128xbf16, #tpu.memory_space<vmem>>, vector<32x128xbf16>
    %131 = arith.truncf %129 : vector<8x32xf32> to vector<8x32xbf16>
    %cst_42 = arith.constant dense<0.000000e+00> : vector<8x128xf32>
    %132 = tpu.matmul %131, %130, %cst_42 {dimension_numbers = #tpu.dot_dimension_numbers<[1], [0], [0], [1], [0, 0, 1, 1], [], []>} : vector<8x32xbf16>, vector<32x128xbf16>, vector<8x128xf32> -> vector<8x128xf32>
    %133 = vector.extract_strided_slice %132 {offsets = [0, 0], sizes = [8, 64], strides = [1, 1]} : vector<8x128xf32> to vector<8x64xf32>
    %134 = vector.extract_strided_slice %132 {offsets = [0, 64], sizes = [8, 64], strides = [1, 1]} : vector<8x128xf32> to vector<8x64xf32>
    %135 = arith.negf %133 : vector<8x64xf32>
    %136 = math.exp %135 : vector<8x64xf32>
    %cst_43 = arith.constant 1.000000e+00 : f32
    %137 = vector.broadcast %cst_43 : f32 to vector<8x64xf32>
    %138 = arith.addf %137, %136 : vector<8x64xf32>
    %139 = arith.divf %137, %138 : vector<8x64xf32>
    %140 = arith.mulf %133, %139 : vector<8x64xf32>
    %141 = arith.mulf %140, %134 : vector<8x64xf32>
    %c0_44 = arith.constant 0 : index
    %c0_45 = arith.constant 0 : index
    %142 = vector.load %arg7[%c0_44, %c0_45] : memref<64x32xbf16, #tpu.memory_space<vmem>>, vector<64x32xbf16>
    %143 = arith.truncf %141 : vector<8x64xf32> to vector<8x64xbf16>
    %cst_46 = arith.constant dense<0.000000e+00> : vector<8x32xf32>
    %144 = tpu.matmul %143, %142, %cst_46 {dimension_numbers = #tpu.dot_dimension_numbers<[1], [0], [0], [1], [0, 0, 1, 1], [], []>} : vector<8x64xbf16>, vector<64x32xbf16>, vector<8x32xf32> -> vector<8x32xf32>
    %145 = arith.addf %116, %144 : vector<8x32xf32>
    %c0_47 = arith.constant 0 : index
    %c0_48 = arith.constant 0 : index
    %146 = vector.load %arg11[%c0_47, %c0_48] : memref<8x32xf32, #tpu.memory_space<vmem>>, vector<8x32xf32>
    tpu.vector_store %arg11[%c0_47, %c0_48], %145 {strides = array<i32>} : memref<8x32xf32, #tpu.memory_space<vmem>>, vector<8x32xf32>,
    return
  }
  func.func @transform_0(%arg0: i32) -> (i32, i32) {
    %c0_i32 = arith.constant 0 : i32
    %c0_i32_0 = arith.constant 0 : i32
    return %arg0, %c0_i32 : i32, i32
  }
  func.func @transform_1(%arg0: i32) -> (i32, i32) {
    %c0_i32 = arith.constant 0 : i32
    %c0_i32_0 = arith.constant 0 : i32
    %c0_i32_1 = arith.constant 0 : i32
    return %c0_i32, %c0_i32_0 : i32, i32
  }
  func.func @transform_2(%arg0: i32) -> (i32, i32) {
    %c0_i32 = arith.constant 0 : i32
    %c0_i32_0 = arith.constant 0 : i32
    %c0_i32_1 = arith.constant 0 : i32
    return %c0_i32, %c0_i32_0 : i32, i32
  }
  func.func @transform_3(%arg0: i32) -> (i32, i32) {
    %c0_i32 = arith.constant 0 : i32
    %c0_i32_0 = arith.constant 0 : i32
    %c0_i32_1 = arith.constant 0 : i32
    return %c0_i32, %c0_i32_0 : i32, i32
  }
  func.func @transform_4(%arg0: i32) -> (i32, i32) {
    %c0_i32 = arith.constant 0 : i32
    %c0_i32_0 = arith.constant 0 : i32
    %c0_i32_1 = arith.constant 0 : i32
    return %c0_i32, %c0_i32_0 : i32, i32
  }
  func.func @transform_5(%arg0: i32) -> (i32, i32) {
    %c0_i32 = arith.constant 0 : i32
    %c0_i32_0 = arith.constant 0 : i32
    %c0_i32_1 = arith.constant 0 : i32
    return %c0_i32, %c0_i32_0 : i32, i32
  }
  func.func @transform_6(%arg0: i32) -> (i32, i32) {
    %c0_i32 = arith.constant 0 : i32
    %c0_i32_0 = arith.constant 0 : i32
    %c0_i32_1 = arith.constant 0 : i32
    return %c0_i32, %c0_i32_0 : i32, i32
  }
  func.func @transform_7(%arg0: i32) -> (i32, i32) {
    %c0_i32 = arith.constant 0 : i32
    %c0_i32_0 = arith.constant 0 : i32
    %c0_i32_1 = arith.constant 0 : i32
    return %c0_i32, %c0_i32_0 : i32, i32
  }
  func.func @transform_8(%arg0: i32) -> (i32, i32) {
    %c0_i32 = arith.constant 0 : i32
    %c0_i32_0 = arith.constant 0 : i32
    %c0_i32_1 = arith.constant 0 : i32
    return %c0_i32, %c0_i32_0 : i32, i32
  }
  func.func @transform_9(%arg0: i32) -> (i32, i32) {
    %c0_i32 = arith.constant 0 : i32
    %c0_i32_0 = arith.constant 0 : i32
    %c0_i32_1 = arith.constant 0 : i32
    return %c0_i32, %c0_i32_0 : i32, i32
  }
  func.func @transform_10(%arg0: i32) -> (i32, i32) {
    %c0_i32 = arith.constant 0 : i32
    %c0_i32_0 = arith.constant 0 : i32
    return %arg0, %c0_i32 : i32, i32
  }
}

</mosaic_0001>

<llo_original>
// kernel: tpu_custom_call.1
$region0: #{tpu_custom_call.1}
  #allocation0 [shape = 'u32[]', space=smem, size = 0x4, offset = 0x4, fixed_abs, tag = 'smem constant byte address 0x4 - core index']
  #allocation1 [shape = 'u32[72,128]{1,0:T(1,128)}', space=vmem, size = 0x9000, scoped, tag = 'internal scratch']
  %s0 = inlined_call_operand.vmem [shape: f32[16,32], index: 0, kind: input, shape index: {}]
  %s1 = inlined_call_operand.hbm [shape: f32[1,32], index: 1, kind: input, shape index: {}]
  %s2 = inlined_call_operand.hbm [shape: f32[1,32], index: 2, kind: input, shape index: {}]
  %s3 = inlined_call_operand.vmem [shape: bf16[32,64], index: 3, kind: input, shape index: {}]
  %s4 = inlined_call_operand.vmem [shape: bf16[32,32], index: 4, kind: input, shape index: {}]
  %s5 = inlined_call_operand.hbm [shape: bf16[32,128], index: 5, kind: input, shape index: {}]
  %s6 = inlined_call_operand.vmem [shape: bf16[64,32], index: 6, kind: input, shape index: {}]
  %s7 = inlined_call_operand.hbm [shape: f32[8,64], index: 7, kind: input, shape index: {}]
  %s8 = inlined_call_operand.hbm [shape: f32[8,64], index: 8, kind: input, shape index: {}]
  %s9 = inlined_call_operand.vmem [shape: f32[8,64], index: 9, kind: input, shape index: {}]
  %s10 = inlined_call_operand.hbm [shape: f32[16,32], index: 10, kind: output, shape index: {}]
  %s11 = sld [smem:[#allocation0]]
  $region93: #{tpu_custom_call.1} parent=0
    _
  %s13 = ssub.s32 1, %s11
  %s14 = scalar_select 0, %s13, %s11
  $region1: #{tpu_custom_call.1} parent=0
    #allocation2 [shape = 'u8[512]{0}', space=vmem, size = 0x400, scoped, tag = 'input window, operand 1, single buffered']
    #allocation3 [shape = 's32[2]{0}', space=sflag, size = 0x8, scoped, tag = 'scoped memory for tpu_custom_call.1']
    #allocation4 [shape = 's32[2]{0}', space=sflag, size = 0x8, scoped, tag = 'scoped memory for tpu_custom_call.1']
    #allocation5 [shape = 'u8[512]{0}', space=vmem, size = 0x400, scoped, tag = 'input window, operand 2, single buffered']
    #allocation6 [shape = 's32[1]{0}', space=sflag, size = 0x4, scoped, tag = 'scoped memory for tpu_custom_call.1']
    #allocation7 [shape = 'u8[8192]{0}', space=vmem, size = 0x2000, scoped, tag = 'input window, operand 5, single buffered']
    #allocation8 [shape = 'u8[4096]{0}', space=vmem, size = 0x1000, scoped, tag = 'input window, operand 7, single buffered']
    #allocation9 [shape = 's32[1]{0}', space=sflag, size = 0x4, scoped, tag = 'scoped memory for tpu_custom_call.1']
    #allocation10 [shape = 'u8[4096]{0}', space=vmem, size = 0x1000, scoped, tag = 'input window, operand 8, single buffered']
    #allocation11 [shape = 'u8[8192]{0}', space=vmem, size = 0x2000, scoped, tag = 'output window, operand 0']
    %15 = vsyncpa [#allocation3], 0
    %16 = vsyncpa [#allocation6], 0
    %17 = vsyncpa [#allocation9], 0
    %18 = vsyncpa [#allocation4], 0
    %s19 = scalar_lea.sflag [#allocation4], 1
    %20 = vsyncpa %s19, 0
    loop: start=0, step=1, limit=4
    $region2: #{tpu_custom_call.1} parent=1 // loop_pre_header
      _
    $region3: #{tpu_custom_call.1} parent=1 // loop_header
      %s22 = sphi 0, %s26
      %p23 = scmp.ge.s32.totalorder %s22, 4
      %s32 = sphi 0, %s34
      %s35 = sphi 0, %s32
      %s36 = sphi 0, %s35
      %s52 = sphi 0, %s36
      %s56 = sphi 0, %s56
      %s58 = sphi 0, %s56
      %s59 = sphi 0, %s58
      %s73 = sphi 0, %s59
      %s77 = sphi 0, %s77
      %s79 = sphi 0, %s77
      %s80 = sphi 0, %s79
      %s94 = sphi 0, %s80
      %s98 = sphi 0, %s98
      %s100 = sphi 0, %s98
      %s101 = sphi 0, %s100
      %s115 = sphi 0, %s101
      %s119 = sphi 0, %s119
      %s121 = sphi 0, %s119
      %s122 = sphi 0, %s121
      %s136 = sphi 0, %s122
      %s140 = sphi 0, %s140
      %s142 = sphi 0, %s140
      %s143 = sphi 0, %s142
      %s157 = sphi 0, %s143
      %s161 = sphi 0, %s161
      %s163 = sphi 0, %s161
      %s164 = sphi 0, %s163
      %s178 = sphi 0, %s164
      %s182 = sphi 0, %s182
      %s184 = sphi 0, %s182
      %s185 = sphi 0, %s184
      %s199 = sphi 0, %s185
      %s203 = sphi 0, %s203
      %s205 = sphi 0, %s203
      %s206 = sphi 0, %s205
      %s220 = sphi 0, %s206
      %s224 = sphi 0, %s224
      %s226 = sphi 0, %s224
      %s227 = sphi 0, %s226
      %s241 = sphi 0, %s227
      %s247 = sphi 0, %s249
      %s250 = sphi 0, %s247
      %s251 = sphi 0, %s250
      %s267 = sphi 0, %s251
    $region4: #{tpu_custom_call.1} parent=1 // loop_header_branch
      %25 = sbr.rel (%p23) target = $region8
    $region5: #{tpu_custom_call.1} parent=1 // loop_body
      %s27 = ssub.s32 %s22, 1
      %s28 = ssub.s32 %s22, 2
      %s29 = sadd.s32 %s22, 1
      %s30 = ssub.s32 %s22, %s29
      %p31 = scmp.eq.s32.totalorder %s30, 0
      %s33 = sadd.s32 %s32, 1
      %s34 = scalar_select %p31, %s32, %s33
      %p37 = pneg %p31
      %p38 = scmp.eq.s32.totalorder %s22, 1
      %p39 = por %p37, %p38
      %p40 = scmp.ne.s32.totalorder %s32, %s35
      %p41 = scmp.eq.s32.totalorder %s22, 0
      %p42 = por %p40, %p41
      %p43 = scmp.ne.s32.totalorder %s32, %s35
      %p44 = scmp.eq.s32.totalorder %s27, 1
      %p45 = por %p43, %p44
      %p46 = scmp.ne.s32.totalorder %s35, %s36
      %p47 = scmp.eq.s32.totalorder %s27, 0
      %p48 = por %p46, %p47
      %p49 = scmp.ne.s32.totalorder %s35, %s36
      %p50 = scmp.eq.s32.totalorder %s28, 1
      %p51 = por %p49, %p50
      %p53 = scmp.ne.s32.totalorder %s36, %s52
      %p54 = scmp.eq.s32.totalorder %s28, 0
      %p55 = por %p53, %p54
      %s57 = sadd.s32 %s56, 1
      %p60 = scmp.eq.s32.totalorder %s22, 1
      %p61 = scmp.ne.s32.totalorder %s56, %s58
      %p62 = scmp.eq.s32.totalorder %s22, 0
      %p63 = por %p61, %p62
      %p64 = scmp.ne.s32.totalorder %s56, %s58
      %p65 = scmp.eq.s32.totalorder %s27, 1
      %p66 = por %p64, %p65
      %p67 = scmp.ne.s32.totalorder %s58, %s59
      %p68 = scmp.eq.s32.totalorder %s27, 0
      %p69 = por %p67, %p68
      %p70 = scmp.ne.s32.totalorder %s58, %s59
      %p71 = scmp.eq.s32.totalorder %s28, 1
      %p72 = por %p70, %p71
      %p74 = scmp.ne.s32.totalorder %s59, %s73
      %p75 = scmp.eq.s32.totalorder %s28, 0
      %p76 = por %p74, %p75
      %s78 = sadd.s32 %s77, 1
      %p81 = scmp.eq.s32.totalorder %s22, 1
      %p82 = scmp.ne.s32.totalorder %s77, %s79
      %p83 = scmp.eq.s32.totalorder %s22, 0
      %p84 = por %p82, %p83
      %p85 = scmp.ne.s32.totalorder %s77, %s79
      %p86 = scmp.eq.s32.totalorder %s27, 1
      %p87 = por %p85, %p86
      %p88 = scmp.ne.s32.totalorder %s79, %s80
      %p89 = scmp.eq.s32.totalorder %s27, 0
      %p90 = por %p88, %p89
      %p91 = scmp.ne.s32.totalorder %s79, %s80
      %p92 = scmp.eq.s32.totalorder %s28, 1
      %p93 = por %p91, %p92
      %p95 = scmp.ne.s32.totalorder %s80, %s94
      %p96 = scmp.eq.s32.totalorder %s28, 0
      %p97 = por %p95, %p96
      %s99 = sadd.s32 %s98, 1
      %p102 = scmp.eq.s32.totalorder %s22, 1
      %p103 = scmp.ne.s32.totalorder %s98, %s100
      %p104 = scmp.eq.s32.totalorder %s22, 0
      %p105 = por %p103, %p104
      %p106 = scmp.ne.s32.totalorder %s98, %s100
      %p107 = scmp.eq.s32.totalorder %s27, 1
      %p108 = por %p106, %p107
      %p109 = scmp.ne.s32.totalorder %s100, %s101
      %p110 = scmp.eq.s32.totalorder %s27, 0
      %p111 = por %p109, %p110
      %p112 = scmp.ne.s32.totalorder %s100, %s101
      %p113 = scmp.eq.s32.totalorder %s28, 1
      %p114 = por %p112, %p113
      %p116 = scmp.ne.s32.totalorder %s101, %s115
      %p117 = scmp.eq.s32.totalorder %s28, 0
      %p118 = por %p116, %p117
      %s120 = sadd.s32 %s119, 1
      %p123 = scmp.eq.s32.totalorder %s22, 1
      %p124 = scmp.ne.s32.totalorder %s119, %s121
      %p125 = scmp.eq.s32.totalorder %s22, 0
      %p126 = por %p124, %p125
      %p127 = scmp.ne.s32.totalorder %s119, %s121
      %p128 = scmp.eq.s32.totalorder %s27, 1
      %p129 = por %p127, %p128
      %p130 = scmp.ne.s32.totalorder %s121, %s122
      %p131 = scmp.eq.s32.totalorder %s27, 0
      %p132 = por %p130, %p131
      %p133 = scmp.ne.s32.totalorder %s121, %s122
      %p134 = scmp.eq.s32.totalorder %s28, 1
      %p135 = por %p133, %p134
      %p137 = scmp.ne.s32.totalorder %s122, %s136
      %p138 = scmp.eq.s32.totalorder %s28, 0
      %p139 = por %p137, %p138
      %s141 = sadd.s32 %s140, 1
      %p144 = scmp.eq.s32.totalorder %s22, 1
      %p145 = scmp.ne.s32.totalorder %s140, %s142
      %p146 = scmp.eq.s32.totalorder %s22, 0
      %p147 = por %p145, %p146
      %p148 = scmp.ne.s32.totalorder %s140, %s142
      %p149 = scmp.eq.s32.totalorder %s27, 1
      %p150 = por %p148, %p149
      %p151 = scmp.ne.s32.totalorder %s142, %s143
      %p152 = scmp.eq.s32.totalorder %s27, 0
      %p153 = por %p151, %p152
      %p154 = scmp.ne.s32.totalorder %s142, %s143
      %p155 = scmp.eq.s32.totalorder %s28, 1
      %p156 = por %p154, %p155
      %p158 = scmp.ne.s32.totalorder %s143, %s157
      %p159 = scmp.eq.s32.totalorder %s28, 0
      %p160 = por %p158, %p159
      %s162 = sadd.s32 %s161, 1
      %p165 = scmp.eq.s32.totalorder %s22, 1
      %p166 = scmp.ne.s32.totalorder %s161, %s163
      %p167 = scmp.eq.s32.totalorder %s22, 0
      %p168 = por %p166, %p167
      %p169 = scmp.ne.s32.totalorder %s161, %s163
      %p170 = scmp.eq.s32.totalorder %s27, 1
      %p171 = por %p169, %p170
      %p172 = scmp.ne.s32.totalorder %s163, %s164
      %p173 = scmp.eq.s32.totalorder %s27, 0
      %p174 = por %p172, %p173
      %p175 = scmp.ne.s32.totalorder %s163, %s164
      %p176 = scmp.eq.s32.totalorder %s28, 1
      %p177 = por %p175, %p176
      %p179 = scmp.ne.s32.totalorder %s164, %s178
      %p180 = scmp.eq.s32.totalorder %s28, 0
      %p181 = por %p179, %p180
      %s183 = sadd.s32 %s182, 1
      %p186 = scmp.eq.s32.totalorder %s22, 1
      %p187 = scmp.ne.s32.totalorder %s182, %s184
      %p188 = scmp.eq.s32.totalorder %s22, 0
      %p189 = por %p187, %p188
      %p190 = scmp.ne.s32.totalorder %s182, %s184
      %p191 = scmp.eq.s32.totalorder %s27, 1
      %p192 = por %p190, %p191
      %p193 = scmp.ne.s32.totalorder %s184, %s185
      %p194 = scmp.eq.s32.totalorder %s27, 0
      %p195 = por %p193, %p194
      %p196 = scmp.ne.s32.totalorder %s184, %s185
      %p197 = scmp.eq.s32.totalorder %s28, 1
      %p198 = por %p196, %p197
      %p200 = scmp.ne.s32.totalorder %s185, %s199
      %p201 = scmp.eq.s32.totalorder %s28, 0
      %p202 = por %p200, %p201
      %s204 = sadd.s32 %s203, 1
      %p207 = scmp.eq.s32.totalorder %s22, 1
      %p208 = scmp.ne.s32.totalorder %s203, %s205
      %p209 = scmp.eq.s32.totalorder %s22, 0
      %p210 = por %p208, %p209
      %p211 = scmp.ne.s32.totalorder %s203, %s205
      %p212 = scmp.eq.s32.totalorder %s27, 1
      %p213 = por %p211, %p212
      %p214 = scmp.ne.s32.totalorder %s205, %s206
      %p215 = scmp.eq.s32.totalorder %s27, 0
      %p216 = por %p214, %p215
      %p217 = scmp.ne.s32.totalorder %s205, %s206
      %p218 = scmp.eq.s32.totalorder %s28, 1
      %p219 = por %p217, %p218
      %p221 = scmp.ne.s32.totalorder %s206, %s220
      %p222 = scmp.eq.s32.totalorder %s28, 0
      %p223 = por %p221, %p222
      %s225 = sadd.s32 %s224, 1
      %p228 = scmp.eq.s32.totalorder %s22, 1
      %p229 = scmp.ne.s32.totalorder %s224, %s226
      %p230 = scmp.eq.s32.totalorder %s22, 0
      %p231 = por %p229, %p230
      %p232 = scmp.ne.s32.totalorder %s224, %s226
      %p233 = scmp.eq.s32.totalorder %s27, 1
      %p234 = por %p232, %p233
      %p235 = scmp.ne.s32.totalorder %s226, %s227
      %p236 = scmp.eq.s32.totalorder %s27, 0
      %p237 = por %p235, %p236
      %p238 = scmp.ne.s32.totalorder %s226, %s227
      %p239 = scmp.eq.s32.totalorder %s28, 1
      %p240 = por %p238, %p239
      %p242 = scmp.ne.s32.totalorder %s227, %s241
      %p243 = scmp.eq.s32.totalorder %s28, 0
      %p244 = por %p242, %p243
      %s245 = ssub.s32 %s22, %s29
      %p246 = scmp.eq.s32.totalorder %s245, 0
      %s248 = sadd.s32 %s247, 1
      %s249 = scalar_select %p246, %s247, %s248
      %p252 = pneg %p246
      %p253 = scmp.eq.s32.totalorder %s22, 1
      %p254 = por %p252, %p253
      %p255 = scmp.ne.s32.totalorder %s247, %s250
      %p256 = scmp.eq.s32.totalorder %s22, 0
      %p257 = por %p255, %p256
      %p258 = scmp.ne.s32.totalorder %s247, %s250
      %p259 = scmp.eq.s32.totalorder %s27, 1
      %p260 = por %p258, %p259
      %p261 = scmp.ne.s32.totalorder %s250, %s251
      %p262 = scmp.eq.s32.totalorder %s27, 0
      %p263 = por %p261, %p262
      %p264 = scmp.ne.s32.totalorder %s250, %s251
      %p265 = scmp.eq.s32.totalorder %s28, 1
      %p266 = por %p264, %p265
      %p268 = scmp.ne.s32.totalorder %s251, %s267
      %p269 = scmp.eq.s32.totalorder %s28, 0
      %p270 = por %p268, %p269
      %p271 = scmp.le.s32.totalorder 1, %s22
      %p272 = scmp.lt.s32.totalorder %s22, 3
      %p273 = pnand %p271, %p272
      %p274 = pneg %p273
      // Predicated region
      $region9: #{tpu_custom_call.1} parent=5 // pred_check
        _
      $region10: #{tpu_custom_call.1} parent=5 // pred_check_branch
        %276 = sbr.rel (%p273) target = $region12
      $region11: #{tpu_custom_call.1} parent=5 // pred_region
        %s277 = ssub.s32 %s22, 1
        // Predicated region
        $region13: #{tpu_custom_call.1} parent=11 // pred_check
          %p278 = pneg %p69
        $region14: #{tpu_custom_call.1} parent=11 // pred_check_branch
          %280 = sbr.rel (%p278) target = $region16
        $region15: #{tpu_custom_call.1} parent=11 // pred_region
          %282 = vsyncadd [#allocation3], 0
          %s284 = sshll.u32 %s1, 4
          %s285 = int_to_ptr.hbm [resolvable:$true] %s284
          %s286 = sshll.u32 [#allocation2], 4
          %s287 = int_to_ptr.vmem [resolvable:$true] %s286
          %289 = dma.hbm_to_vmem [thread:$0]  %s285, 16, %s287, [#allocation3]
        $region16: #{tpu_custom_call.1} parent=11 // pred_fallthru
          _
        // Predicated region
        $region17: #{tpu_custom_call.1} parent=11 // pred_check
          %p290 = pneg %p90
        $region18: #{tpu_custom_call.1} parent=11 // pred_check_branch
          %292 = sbr.rel (%p290) target = $region20
        $region19: #{tpu_custom_call.1} parent=11 // pred_region
          %294 = vsyncadd [#allocation6], 0
          %s296 = sshll.u32 %s2, 4
          %s297 = int_to_ptr.hbm [resolvable:$true] %s296
          %s298 = sshll.u32 [#allocation5], 4
          %s299 = int_to_ptr.vmem [resolvable:$true] %s298
          %301 = dma.hbm_to_vmem [thread:$0]  %s297, 16, %s299, [#allocation6]
        $region20: #{tpu_custom_call.1} parent=11 // pred_fallthru
          _
        // Predicated region
        $region21: #{tpu_custom_call.1} parent=11 // pred_check
          %p302 = pneg %p111
        $region22: #{tpu_custom_call.1} parent=11 // pred_check_branch
          %304 = sbr.rel (%p302) target = $region24
        $region23: #{tpu_custom_call.1} parent=11 // pred_region
          _
        $region24: #{tpu_custom_call.1} parent=11 // pred_fallthru
          _
        // Predicated region
        $region25: #{tpu_custom_call.1} parent=11 // pred_check
          %p305 = pneg %p132
        $region26: #{tpu_custom_call.1} parent=11 // pred_check_branch
          %307 = sbr.rel (%p305) target = $region28
        $region27: #{tpu_custom_call.1} parent=11 // pred_region
          _
        $region28: #{tpu_custom_call.1} parent=11 // pred_fallthru
          _
        // Predicated region
        $region29: #{tpu_custom_call.1} parent=11 // pred_check
          %p308 = pneg %p153
        $region30: #{tpu_custom_call.1} parent=11 // pred_check_branch
          %310 = sbr.rel (%p308) target = $region32
        $region31: #{tpu_custom_call.1} parent=11 // pred_region
          %312 = vsyncadd [#allocation6], 0
          %s313 = sshll.u32 %s5, 4
          %s314 = int_to_ptr.hbm [resolvable:$true] %s313
          %s315 = sshll.u32 [#allocation7], 4
          %s316 = int_to_ptr.vmem [resolvable:$true] %s315
          %321 = dma.hbm_to_vmem [thread:$0]  %s314, 256, %s316, [#allocation6], 64, 64, 4
        $region32: #{tpu_custom_call.1} parent=11 // pred_fallthru
          _
        // Predicated region
        $region33: #{tpu_custom_call.1} parent=11 // pred_check
          %p322 = pneg %p174
        $region34: #{tpu_custom_call.1} parent=11 // pred_check_branch
          %324 = sbr.rel (%p322) target = $region36
        $region35: #{tpu_custom_call.1} parent=11 // pred_region
          _
        $region36: #{tpu_custom_call.1} parent=11 // pred_fallthru
          _
        // Predicated region
        $region37: #{tpu_custom_call.1} parent=11 // pred_check
          %p325 = pneg %p195
        $region38: #{tpu_custom_call.1} parent=11 // pred_check_branch
          %327 = sbr.rel (%p325) target = $region40
        $region39: #{tpu_custom_call.1} parent=11 // pred_region
          %329 = vsyncadd [#allocation9], 0
          %s331 = sshll.u32 %s7, 4
          %s332 = int_to_ptr.hbm [resolvable:$true] %s331
          %s333 = sshll.u32 [#allocation8], 4
          %s334 = int_to_ptr.vmem [resolvable:$true] %s333
          %336 = dma.hbm_to_vmem [thread:$0]  %s332, 128, %s334, [#allocation9]
        $region40: #{tpu_custom_call.1} parent=11 // pred_fallthru
          _
        // Predicated region
        $region41: #{tpu_custom_call.1} parent=11 // pred_check
          %p337 = pneg %p216
        $region42: #{tpu_custom_call.1} parent=11 // pred_check_branch
          %339 = sbr.rel (%p337) target = $region44
        $region43: #{tpu_custom_call.1} parent=11 // pred_region
          %341 = vsyncadd [#allocation9], 0
          %s343 = sshll.u32 %s8, 4
          %s344 = int_to_ptr.hbm [resolvable:$true] %s343
          %s345 = sshll.u32 [#allocation10], 4
          %s346 = int_to_ptr.vmem [resolvable:$true] %s345
          %348 = dma.hbm_to_vmem [thread:$0]  %s344, 128, %s346, [#allocation9]
        $region44: #{tpu_custom_call.1} parent=11 // pred_fallthru
          _
        // Predicated region
        $region45: #{tpu_custom_call.1} parent=11 // pred_check
          %p349 = pneg %p237
        $region46: #{tpu_custom_call.1} parent=11 // pred_check_branch
          %351 = sbr.rel (%p349) target = $region48
        $region47: #{tpu_custom_call.1} parent=11 // pred_region
          _
        $region48: #{tpu_custom_call.1} parent=11 // pred_fallthru
          _
      $region12: #{tpu_custom_call.1} parent=5 // pred_fallthru
        _
      %p352 = scmp.lt.s32.totalorder %s22, 2
      // Predicated region
      $region49: #{tpu_custom_call.1} parent=5 // pred_check
        %p353 = pneg %p352
      $region50: #{tpu_custom_call.1} parent=5 // pred_check_branch
        %355 = sbr.rel (%p353) target = $region52
      $region51: #{tpu_custom_call.1} parent=5 // pred_region
        // Predicated region
        $region53: #{tpu_custom_call.1} parent=51 // pred_check
          %p356 = pneg %p42
        $region54: #{tpu_custom_call.1} parent=51 // pred_check_branch
          %358 = sbr.rel (%p356) target = $region56
        $region55: #{tpu_custom_call.1} parent=51 // pred_region
          %p359 = scmp.lt.s32.totalorder %s22, 1
          %s360 = scalar_select %p359, %s22, 1
          %s361 = smul.addr %s360, 8
          %s362 = scalar_lea.vmem %s0, %s361
        $region56: #{tpu_custom_call.1} parent=51 // pred_fallthru
          _
      $region52: #{tpu_custom_call.1} parent=5 // pred_fallthru
        _
      %p363 = scmp.le.s32.totalorder 1, %s22
      %p364 = scmp.lt.s32.totalorder %s22, 3
      %p365 = pnand %p363, %p364
      %p366 = pneg %p365
      // Predicated region
      $region57: #{tpu_custom_call.1} parent=5 // pred_check
        _
      $region58: #{tpu_custom_call.1} parent=5 // pred_check_branch
        %368 = sbr.rel (%p365) target = $region60
      $region59: #{tpu_custom_call.1} parent=5 // pred_region
        %s369 = ssub.s32 %s22, 1
        // Predicated region
        $region61: #{tpu_custom_call.1} parent=59 // pred_check
          %p370 = pneg %p69
        $region62: #{tpu_custom_call.1} parent=59 // pred_check_branch
          %372 = sbr.rel (%p370) target = $region64
        $region63: #{tpu_custom_call.1} parent=59 // pred_region
          %374 = dma.done [#allocation3], 16
        $region64: #{tpu_custom_call.1} parent=59 // pred_fallthru
          _
        // Predicated region
        $region65: #{tpu_custom_call.1} parent=59 // pred_check
          %p375 = pneg %p90
        $region66: #{tpu_custom_call.1} parent=59 // pred_check_branch
          %377 = sbr.rel (%p375) target = $region68
        $region67: #{tpu_custom_call.1} parent=59 // pred_region
          %379 = dma.done [#allocation6], 16
        $region68: #{tpu_custom_call.1} parent=59 // pred_fallthru
          _
        // Predicated region
        $region69: #{tpu_custom_call.1} parent=59 // pred_check
          %p380 = pneg %p153
        $region70: #{tpu_custom_call.1} parent=59 // pred_check_branch
          %382 = sbr.rel (%p380) target = $region72
        $region71: #{tpu_custom_call.1} parent=59 // pred_region
          %384 = dma.done [#allocation6], 256
        $region72: #{tpu_custom_call.1} parent=59 // pred_fallthru
          _
        // Predicated region
        $region73: #{tpu_custom_call.1} parent=59 // pred_check
          %p385 = pneg %p195
        $region74: #{tpu_custom_call.1} parent=59 // pred_check_branch
          %387 = sbr.rel (%p385) target = $region76
        $region75: #{tpu_custom_call.1} parent=59 // pred_region
          %389 = dma.done [#allocation9], 128
        $region76: #{tpu_custom_call.1} parent=59 // pred_fallthru
          _
        // Predicated region
        $region77: #{tpu_custom_call.1} parent=59 // pred_check
          %p390 = pneg %p216
        $region78: #{tpu_custom_call.1} parent=59 // pred_check_branch
          %392 = sbr.rel (%p390) target = $region80
        $region79: #{tpu_custom_call.1} parent=59 // pred_region
          %394 = dma.done [#allocation9], 128
        $region80: #{tpu_custom_call.1} parent=59 // pred_fallthru
          _
        %p395 = scmp.lt.s32.totalorder %s27, 1
        %s396 = scalar_select %p395, %s27, 1
        %s397 = smul.addr %s396, 8
        %s398 = scalar_lea.vmem %s0, %s397
        %p399 = pneg %p48
        %p400 = pneg %p45
        %p401 = pneg %p69
        %p402 = pneg %p66
        %p403 = pneg %p90
        %p404 = pneg %p87
        %p405 = pneg %p111
        %p406 = pneg %p108
        %p407 = pneg %p132
        %p408 = pneg %p129
        %p409 = pneg %p153
        %p410 = pneg %p150
        %p411 = pneg %p174
        %p412 = pneg %p171
        %p413 = pneg %p195
        %p414 = pneg %p192
        %p415 = pneg %p216
        %p416 = pneg %p213
        %p417 = pneg %p237
        %p418 = pneg %p234
        %p419 = pneg %p263
        %p420 = pneg %p260
        %s421 = sand.u32 %s250, 1
        %s422 = scalar_lea.sflag [#allocation4], %s421
        %s423 = sand.u32 %s250, 1
        %s424 = smul.addr %s423, 8
        %s425 = scalar_lea.vmem [#allocation11], %s424
        %p426 = scmp.lt.s32.totalorder %s27, 1
        %s427 = scalar_select %p426, %s27, 1
        %s428 = smul.addr %s427, 8
        %s429 = scalar_lea.vmem %s0, %s428
        %v431 = vld [vmem:[%s429] sm:$0xff]
        %v432 = vld [vmem:[#allocation2] sm:$0x1]
        %v433 = vmul.f32 %v431, %v431
        %vm434 = vcmask 261120
        %v435 = vsel %vm434, %v433, 0.0
        %436 = vadd.xlane.f32.xlu0 %v435
        %v437 = vpop.xlane.xlu0 %436
        %v438 = vrcp.pop 32.0
        %v439 = vmul.f32 32.0, %v438
        %v440 = vsub.f32 1.0, %v439
        %v441 = vmul.f32 %v438, %v440
        %v442 = vadd.f32 %v438, %v441
        %vm443 = vweird.f32 %v438
        %v444 = vsel %vm443, %v438, %v442
        %v445 = vmul.f32 %v437, %v444
        %v446 = vadd.f32 %v445, 1e-05
        %v447 = vrsqrt.pop %v446
        %v448 = vmul.f32 %v447, %v446
        %v449 = vmul.f32 %v448, %v447
        %v450 = vmul.f32 0.5, %v449
        %v451 = vsub.f32 1.5, %v450
        %v452 = vmul.f32 %v447, %v451
        %vm453 = vweird.f32 %v446
        %vm454 = vweird.f32 %v447
        %vm455 = vmor %vm453, %vm454
        %v456 = vsel %vm455, %v447, %v452
        %v457 = vmul.f32 %v431, %v456
        %v459 = vperm.slane %v432, 0
        %v461 = vmul.f32 %v457, %v459
        %v462 = vld [vmem:[%s3] sm:$0xf]
        %v463 = vld [vmem:[%s3 + $0x4] sm:$0xf]
        %v464 = vld [vmem:[%s3 + $0x8] sm:$0xf]
        %v465 = vld [vmem:[%s3 + $0xc] sm:$0xf]
        %v466 = vpack.c.bf16 %v461, %v461
        %v471 = vunpack.c.l.b16 %v462
        %v472 = vunpack.c.l.b16 %v463
        %v473 = vunpack.c.l.b16 %v464
        %v474 = vunpack.c.l.b16 %v465
        %v475 = vpack.c.b16 %v472, %v471
        %v476 = vpack.c.b16 %v474, %v473
        %v480 = vsel %vm434, %v466, 0
        %482 = vmatpush.bf16.msra.mxu0 0
        %483 = vmatpush.bf16.msra.mxu0 0
        %484 = vmatpush.bf16.msra.mxu0 0
        %485 = vmatpush.bf16.msra.mxu0 0
        %486 = vmatpush.bf16.msra.mxu0 0
        %487 = vmatpush.bf16.msra.mxu0 0
        %488 = vmatpush.bf16.msra.mxu0 %v476
        %489 = vmatpush.bf16.msra.mxu0 %v475
        %490 = vmatmul.bf16.gmra.mxu0 %v480
        %v491 = vpop.f32.mrf.mxu0
        %v492 = vadd.f32 0.0, %v491
        %v493 = vpop.f32.mrf.mxu0
        %494 = vdwg.mxu0
        %v495 = vld [vmem:[#allocation8] sm:$0xff]
        %v496 = vmul.f32 %v492, %v495
        %498 = vrot.lane.b32.xlu0 %v492, 124
        %v499 = vpop.permute.xlu0 %498
        %501 = vrot.lane.b32.xlu0 %v492, 60
        %v502 = vpop.permute.xlu0 %501
        %vm504 = vcmask 490496
        %v505 = vsel %vm504, %v499, %v502
        %v506 = vld [vmem:[#allocation10] sm:$0xff]
        %v507 = vmul.f32 %v505, %v506
        %v508 = vadd.f32 %v496, %v507
        %509 = vrot.lane.b32.xlu0 %v492, 68
        %v510 = vpop.permute.xlu0 %509
        %512 = vrot.lane.b32.xlu0 %v492, 4
        %v513 = vpop.permute.xlu0 %512
        %vm515 = vcmask 31744
        %v516 = vsel %vm515, %v510, %v513
        %v517 = vld [vmem:[%s9] sm:$0xff]
        %v518 = vmul.f32 %v516, %v517
        %v519 = vadd.f32 %v508, %v518
        %v520 = vlaneseq
        %v521 = vshrl.u32 %v520, 7
        %v522 = vlaneseq
        %v523 = vand.u32 %v522, 127
        %vm524 = vcmp.le.s32.totalorder %v523, %v521
        %v525 = vsel %vm524, 0.0, -1e+09
        %v526 = vpack.c.bf16 %v519, %v519
        %528 = vrot.lane.b32.xlu0 %v526, 96
        %v529 = vpop.permute.xlu0 %528
        %vm530 = vcmask 64512
        %v532 = vsel %vm530, %v526, 0
        %v535 = vsel %vm530, %v529, 0
        %537 = vmatpush.bf16.xpose.msra.mxu0 0
        %538 = vmatpush.bf16.xpose.msra.mxu0 0
        %539 = vmatpush.bf16.xpose.msra.mxu0 0
        %540 = vmatpush.bf16.xpose.msra.mxu0 0
        %541 = vmatpush.bf16.xpose.msra.mxu0 0
        %542 = vmatpush.bf16.xpose.msra.mxu0 0
        %543 = vmatpush.bf16.xpose.msra.mxu0 0
        %544 = vmatpush.bf16.xpose.msra.mxu0 %v535
        %545 = vmatmul.bf16.gmra.mxu0 %v532
        %v546 = vpop.f32.mrf.mxu0
        %v547 = vadd.f32 %v525, %v546
        %v548 = vpop.f32.mrf.mxu0
        %549 = vdwg.mxu0
        %v550 = vsel %vm530, %v547, -inf
        %551 = vmax.xlane.f32.xlu0 %v550
        %v552 = vpop.xlane.xlu0 %551
        %v553 = vsub.f32 %v547, %v552
        %v554 = vmul.f32 %v553, 1.442695
        %v555 = vpow.pop %v554
        %v556 = vsel %vm530, %v555, 0.0
        %557 = vadd.xlane.f32.xlu0 %v556
        %v558 = vpop.xlane.xlu0 %557
        %v559 = vrcp.pop %v558
        %v560 = vmul.f32 %v555, %v559
        %v561 = vpack.c.bf16 %v560, %v560
        %562 = vrot.lane.b32.xlu0 %v526, 80
        %v563 = vpop.permute.xlu0 %562
        %v565 = vsel %vm530, %v561, 0
        %vm567 = vcmask 1043456
        %v569 = vsel %vm567, %v563, 0
        %571 = vmatpush.bf16.msra.mxu0 0
        %572 = vmatpush.bf16.msra.mxu0 0
        %573 = vmatpush.bf16.msra.mxu0 0
        %574 = vmatpush.bf16.msra.mxu0 0
        %575 = vmatpush.bf16.msra.mxu0 0
        %576 = vmatpush.bf16.msra.mxu0 0
        %577 = vmatpush.bf16.msra.mxu0 0
        %578 = vmatpush.bf16.msra.mxu0 %v569
        %579 = vmatmul.bf16.gmra.mxu0 %v565
        %v580 = vpop.f32.mrf.mxu0
        %v581 = vadd.f32 0.0, %v580
        %v582 = vpop.f32.mrf.mxu0
        %583 = vdwg.mxu0
        %584 = vrot.lane.b32.xlu0 %v526, 120
        %v585 = vpop.permute.xlu0 %584
        %v587 = vsel %vm530, %v585, 0
        %589 = vmatpush.bf16.xpose.msra.mxu0 0
        %590 = vmatpush.bf16.xpose.msra.mxu0 0
        %591 = vmatpush.bf16.xpose.msra.mxu0 0
        %592 = vmatpush.bf16.xpose.msra.mxu0 0
        %593 = vmatpush.bf16.xpose.msra.mxu0 0
        %594 = vmatpush.bf16.xpose.msra.mxu0 0
        %595 = vmatpush.bf16.xpose.msra.mxu0 0
        %596 = vmatpush.bf16.xpose.msra.mxu0 %v535
        %597 = vmatmul.bf16.gmra.mxu0 %v587
        %v598 = vpop.f32.mrf.mxu0
        %v599 = vadd.f32 %v525, %v598
        %v600 = vpop.f32.mrf.mxu0
        %601 = vdwg.mxu0
        %v602 = vsel %vm530, %v599, -inf
        %603 = vmax.xlane.f32.xlu0 %v602
        %v604 = vpop.xlane.xlu0 %603
        %v605 = vsub.f32 %v599, %v604
        %v606 = vmul.f32 %v605, 1.442695
        %v607 = vpow.pop %v606
        %v608 = vsel %vm530, %v607, 0.0
        %609 = vadd.xlane.f32.xlu0 %v608
        %v610 = vpop.xlane.xlu0 %609
        %v611 = vrcp.pop %v610
        %v612 = vmul.f32 %v607, %v611
        %v613 = vpack.c.bf16 %v612, %v612
        %v615 = vsel %vm530, %v613, 0
        %617 = vmatpush.bf16.msra.mxu0 0
        %618 = vmatpush.bf16.msra.mxu0 0
        %619 = vmatpush.bf16.msra.mxu0 0
        %620 = vmatpush.bf16.msra.mxu0 0
        %621 = vmatpush.bf16.msra.mxu0 0
        %622 = vmatpush.bf16.msra.mxu0 0
        %623 = vmatpush.bf16.msra.mxu0 0
        %624 = vmatpush.bf16.msra.mxu0 %v569
        %625 = vmatmul.bf16.gmra.mxu0 %v615
        %v626 = vpop.f32.mrf.mxu0
        %v627 = vadd.f32 0.0, %v626
        %v628 = vpop.f32.mrf.mxu0
        %629 = vdwg.mxu0
        %630 = vrot.lane.b32.xlu0 %v526, 112
        %v631 = vpop.permute.xlu0 %630
        %632 = vrot.lane.b32.xlu0 %v526, 88
        %v633 = vpop.permute.xlu0 %632
        %v635 = vsel %vm530, %v631, 0
        %v638 = vsel %vm530, %v633, 0
        %640 = vmatpush.bf16.xpose.msra.mxu0 0
        %641 = vmatpush.bf16.xpose.msra.mxu0 0
        %642 = vmatpush.bf16.xpose.msra.mxu0 0
        %643 = vmatpush.bf16.xpose.msra.mxu0 0
        %644 = vmatpush.bf16.xpose.msra.mxu0 0
        %645 = vmatpush.bf16.xpose.msra.mxu0 0
        %646 = vmatpush.bf16.xpose.msra.mxu0 0
        %647 = vmatpush.bf16.xpose.msra.mxu0 %v638
        %648 = vmatmul.bf16.gmra.mxu0 %v635
        %v649 = vpop.f32.mrf.mxu0
        %v650 = vadd.f32 %v525, %v649
        %v651 = vpop.f32.mrf.mxu0
        %652 = vdwg.mxu0
        %v653 = vsel %vm530, %v650, -inf
        %654 = vmax.xlane.f32.xlu0 %v653
        %v655 = vpop.xlane.xlu0 %654
        %v656 = vsub.f32 %v650, %v655
        %v657 = vmul.f32 %v656, 1.442695
        %v658 = vpow.pop %v657
        %v659 = vsel %vm530, %v658, 0.0
        %660 = vadd.xlane.f32.xlu0 %v659
        %v661 = vpop.xlane.xlu0 %660
        %v662 = vrcp.pop %v661
        %v663 = vmul.f32 %v658, %v662
        %v664 = vpack.c.bf16 %v663, %v663
        %665 = vrot.lane.b32.xlu0 %v526, 72
        %v666 = vpop.permute.xlu0 %665
        %v668 = vsel %vm530, %v664, 0
        %v671 = vsel %vm567, %v666, 0
        %673 = vmatpush.bf16.msra.mxu0 0
        %674 = vmatpush.bf16.msra.mxu0 0
        %675 = vmatpush.bf16.msra.mxu0 0
        %676 = vmatpush.bf16.msra.mxu0 0
        %677 = vmatpush.bf16.msra.mxu0 0
        %678 = vmatpush.bf16.msra.mxu0 0
        %679 = vmatpush.bf16.msra.mxu0 0
        %680 = vmatpush.bf16.msra.mxu0 %v671
        %681 = vmatmul.bf16.gmra.mxu0 %v668
        %v682 = vpop.f32.mrf.mxu0
        %v683 = vadd.f32 0.0, %v682
        %v684 = vpop.f32.mrf.mxu0
        %685 = vdwg.mxu0
        %686 = vrot.lane.b32.xlu0 %v526, 104
        %v687 = vpop.permute.xlu0 %686
        %v689 = vsel %vm530, %v687, 0
        %691 = vmatpush.bf16.xpose.msra.mxu0 0
        %692 = vmatpush.bf16.xpose.msra.mxu0 0
        %693 = vmatpush.bf16.xpose.msra.mxu0 0
        %694 = vmatpush.bf16.xpose.msra.mxu0 0
        %695 = vmatpush.bf16.xpose.msra.mxu0 0
        %696 = vmatpush.bf16.xpose.msra.mxu0 0
        %697 = vmatpush.bf16.xpose.msra.mxu0 0
        %698 = vmatpush.bf16.xpose.msra.mxu0 %v638
        %699 = vmatmul.bf16.gmra.mxu0 %v689
        %v700 = vpop.f32.mrf.mxu0
        %v701 = vadd.f32 %v525, %v700
        %v702 = vpop.f32.mrf.mxu0
        %703 = vdwg.mxu0
        %v704 = vsel %vm530, %v701, -inf
        %705 = vmax.xlane.f32.xlu0 %v704
        %v706 = vpop.xlane.xlu0 %705
        %v707 = vsub.f32 %v701, %v706
        %v708 = vmul.f32 %v707, 1.442695
        %v709 = vpow.pop %v708
        %v710 = vsel %vm530, %v709, 0.0
        %711 = vadd.xlane.f32.xlu0 %v710
        %v712 = vpop.xlane.xlu0 %711
        %v713 = vrcp.pop %v712
        %v714 = vmul.f32 %v709, %v713
        %v715 = vpack.c.bf16 %v714, %v714
        %v717 = vsel %vm530, %v715, 0
        %719 = vmatpush.bf16.msra.mxu0 0
        %720 = vmatpush.bf16.msra.mxu0 0
        %721 = vmatpush.bf16.msra.mxu0 0
        %722 = vmatpush.bf16.msra.mxu0 0
        %723 = vmatpush.bf16.msra.mxu0 0
        %724 = vmatpush.bf16.msra.mxu0 0
        %725 = vmatpush.bf16.msra.mxu0 0
        %726 = vmatpush.bf16.msra.mxu0 %v671
        %727 = vmatmul.bf16.gmra.mxu0 %v717
        %v728 = vpop.f32.mrf.mxu0
        %v729 = vadd.f32 0.0, %v728
        %v730 = vpop.f32.mrf.mxu0
        %731 = vdwg.mxu0
        %733 = vrot.lane.b32.xlu0 %v627, 8
        %v734 = vpop.permute.xlu0 %733
        %737 = vrot.lane.b32.xlu0 %v683, 16
        %v738 = vpop.permute.xlu0 %737
        %741 = vrot.lane.b32.xlu0 %v729, 24
        %v742 = vpop.permute.xlu0 %741
        %v744 = vsel %vm530, %v581, %v734
        %vm745 = vcmask 130048
        %v746 = vsel %vm745, %v744, %v738
        %vm747 = vcmask 195584
        %v748 = vsel %vm747, %v746, %v742
        %v749 = vld [vmem:[%s4] sm:$0xf]
        %v750 = vld [vmem:[%s4 + $0x4] sm:$0xf]
        %v751 = vld [vmem:[%s4 + $0x8] sm:$0xf]
        %v752 = vld [vmem:[%s4 + $0xc] sm:$0xf]
        %v753 = vpack.c.bf16 %v748, %v748
        %v758 = vunpack.c.l.b16 %v749
        %v759 = vunpack.c.l.b16 %v750
        %v760 = vunpack.c.l.b16 %v751
        %v761 = vunpack.c.l.b16 %v752
        %v762 = vpack.c.b16 %v759, %v758
        %v763 = vpack.c.b16 %v761, %v760
        %v767 = vsel %vm434, %v753, 0
        %769 = vmatpush.bf16.msra.mxu0 0
        %770 = vmatpush.bf16.msra.mxu0 0
        %771 = vmatpush.bf16.msra.mxu0 0
        %772 = vmatpush.bf16.msra.mxu0 0
        %773 = vmatpush.bf16.msra.mxu0 0
        %774 = vmatpush.bf16.msra.mxu0 0
        %775 = vmatpush.bf16.msra.mxu0 %v763
        %776 = vmatpush.bf16.msra.mxu0 %v762
        %777 = vmatmul.bf16.gmra.mxu0 %v767
        %v778 = vpop.f32.mrf.mxu0
        %v779 = vadd.f32 0.0, %v778
        %v780 = vpop.f32.mrf.mxu0
        %781 = vdwg.mxu0
        %v782 = vadd.f32 %v431, %v779
        %v783 = vld [vmem:[#allocation5] sm:$0x1]
        %v784 = vmul.f32 %v782, %v782
        %v785 = vsel %vm434, %v784, 0.0
        %786 = vadd.xlane.f32.xlu0 %v785
        %v787 = vpop.xlane.xlu0 %786
        %v788 = vmul.f32 %v787, %v444
        %v789 = vadd.f32 %v788, 1e-05
        %v790 = vrsqrt.pop %v789
        %v791 = vmul.f32 %v790, %v789
        %v792 = vmul.f32 %v791, %v790
        %v793 = vmul.f32 0.5, %v792
        %v794 = vsub.f32 1.5, %v793
        %v795 = vmul.f32 %v790, %v794
        %vm796 = vweird.f32 %v789
        %vm797 = vweird.f32 %v790
        %vm798 = vmor %vm796, %vm797
        %v799 = vsel %vm798, %v790, %v795
        %v800 = vmul.f32 %v782, %v799
        %v802 = vperm.slane %v783, 0
        %v804 = vmul.f32 %v800, %v802
        %v805 = vld [vmem:[#allocation7] sm:$0xf]
        %v806 = vld [vmem:[#allocation7 + $0x4] sm:$0xf]
        %v807 = vld [vmem:[#allocation7 + $0x8] sm:$0xf]
        %v808 = vld [vmem:[#allocation7 + $0xc] sm:$0xf]
        %v809 = vpack.c.bf16 %v804, %v804
        %v814 = vunpack.c.l.b16 %v805
        %v815 = vunpack.c.l.b16 %v806
        %v816 = vunpack.c.l.b16 %v807
        %v817 = vunpack.c.l.b16 %v808
        %v818 = vpack.c.b16 %v815, %v814
        %v819 = vpack.c.b16 %v817, %v816
        %v823 = vsel %vm434, %v809, 0
        %825 = vmatpush.bf16.msra.mxu0 0
        %826 = vmatpush.bf16.msra.mxu0 0
        %827 = vmatpush.bf16.msra.mxu0 0
        %828 = vmatpush.bf16.msra.mxu0 0
        %829 = vmatpush.bf16.msra.mxu0 0
        %830 = vmatpush.bf16.msra.mxu0 0
        %831 = vmatpush.bf16.msra.mxu0 %v819
        %832 = vmatpush.bf16.msra.mxu0 %v818
        %833 = vmatmul.bf16.gmra.mxu0 %v823
        %v834 = vpop.f32.mrf.mxu0
        %v835 = vadd.f32 0.0, %v834
        %v836 = vpop.f32.mrf.mxu0
        %837 = vdwg.mxu0
        %v838 = vxor.u32 %v835, 2147483648
        %v839 = vmul.f32 %v838, 1.442695
        %v840 = vpow.pop %v839
        %v841 = vadd.f32 %v840, 1.0
        %v842 = vrcp.pop %v841
        %v843 = vmul.f32 %v841, %v842
        %v844 = vsub.f32 1.0, %v843
        %v845 = vmul.f32 %v842, %v844
        %v846 = vadd.f32 %v842, %v845
        %vm847 = vweird.f32 %v841
        %vm848 = vweird.f32 %v842
        %vm849 = vmor %vm847, %vm848
        %v850 = vsel %vm849, %v842, %v846
        %v851 = vand.u32 2147483647, %v841
        %vm852 = vcmp.eq.f32.partialorder %v851, 8.507059e+37
        %v853 = vand.u32 %v841, 2147483648
        %v854 = vor.u32 1.1754944e-38, %v853
        %v855 = vsel %vm852, %v854, %v850
        %v856 = vmul.f32 1.0, %v855
        %v857 = vmul.f32 %v835, %v856
        %859 = vrot.lane.b32.xlu0 %v835, 64
        %v860 = vpop.permute.xlu0 %859
        %v862 = vmul.f32 %v857, %v860
        %v863 = vld [vmem:[%s6] sm:$0xf]
        %v864 = vld [vmem:[%s6 + $0x4] sm:$0xf]
        %v865 = vld [vmem:[%s6 + $0x8] sm:$0xf]
        %v866 = vld [vmem:[%s6 + $0xc] sm:$0xf]
        %v867 = vld [vmem:[%s6 + $0x10] sm:$0xf]
        %v868 = vld [vmem:[%s6 + $0x14] sm:$0xf]
        %v869 = vld [vmem:[%s6 + $0x18] sm:$0xf]
        %v870 = vld [vmem:[%s6 + $0x1c] sm:$0xf]
        %v871 = vpack.c.bf16 %v862, %v862
        %v880 = vunpack.c.l.b16 %v863
        %v881 = vunpack.c.l.b16 %v864
        %v882 = vunpack.c.l.b16 %v865
        %v883 = vunpack.c.l.b16 %v866
        %v884 = vunpack.c.l.b16 %v867
        %v885 = vunpack.c.l.b16 %v868
        %v886 = vunpack.c.l.b16 %v869
        %v887 = vunpack.c.l.b16 %v870
        %v888 = vpack.c.b16 %v881, %v880
        %v889 = vpack.c.b16 %v883, %v882
        %v890 = vpack.c.b16 %v885, %v884
        %v891 = vpack.c.b16 %v887, %v886
        %vm896 = vcmask 523264
        %v898 = vsel %vm896, %v871, 0
        %900 = vmatpush.bf16.msra.mxu0 0
        %901 = vmatpush.bf16.msra.mxu0 0
        %902 = vmatpush.bf16.msra.mxu0 0
        %903 = vmatpush.bf16.msra.mxu0 0
        %904 = vmatpush.bf16.msra.mxu0 %v891
        %905 = vmatpush.bf16.msra.mxu0 %v890
        %906 = vmatpush.bf16.msra.mxu0 %v889
        %907 = vmatpush.bf16.msra.mxu0 %v888
        %908 = vmatmul.bf16.gmra.mxu0 %v898
        %v909 = vpop.f32.mrf.mxu0
        %v910 = vadd.f32 0.0, %v909
        %v911 = vpop.f32.mrf.mxu0
        %912 = vdwg.mxu0
        %v913 = vadd.f32 %v782, %v910
        %914 = vst.msk [vmem:[%s425] sm:$0xff] %vm434, %v913
        %s915 = sand.u32 %s250, 1
        %s916 = scalar_lea.sflag [#allocation4], %s915
        %s917 = sand.u32 %s250, 1
        %s918 = smul.addr %s917, 8
        %s919 = scalar_lea.vmem [#allocation11], %s918
        // Predicated region
        $region81: #{tpu_custom_call.1} parent=59 // pred_check
          %p920 = pneg %p260
        $region82: #{tpu_custom_call.1} parent=59 // pred_check_branch
          %922 = sbr.rel (%p920) target = $region84
        $region83: #{tpu_custom_call.1} parent=59 // pred_region
          %924 = vsyncadd %s916, 0
          %s925 = smul.addr %s27, 8
          %s926 = scalar_lea.hbm %s10, %s925
          %s928 = sshll.u32 %s919, 4
          %s929 = int_to_ptr.vmem [resolvable:$true] %s928
          %s930 = sshll.u32 %s926, 4
          %s931 = int_to_ptr.hbm [resolvable:$true] %s930
          %933 = dma.vmem_to_hbm [thread:$0]  %s929, 128, %s931, %s916
        $region84: #{tpu_custom_call.1} parent=59 // pred_fallthru
          _
      $region60: #{tpu_custom_call.1} parent=5 // pred_fallthru
        _
      %p934 = scmp.le.s32.totalorder 2, %s22
      // Predicated region
      $region85: #{tpu_custom_call.1} parent=5 // pred_check
        %p935 = pneg %p934
      $region86: #{tpu_custom_call.1} parent=5 // pred_check_branch
        %937 = sbr.rel (%p935) target = $region88
      $region87: #{tpu_custom_call.1} parent=5 // pred_region
        %s938 = ssub.s32 %s22, 2
        // Predicated region
        $region89: #{tpu_custom_call.1} parent=87 // pred_check
          %p939 = pneg %p266
        $region90: #{tpu_custom_call.1} parent=87 // pred_check_branch
          %941 = sbr.rel (%p939) target = $region92
        $region91: #{tpu_custom_call.1} parent=87 // pred_region
          %s942 = sand.u32 %s251, 1
          %s943 = scalar_lea.sflag [#allocation4], %s942
          %s944 = sand.u32 %s251, 1
          %s945 = smul.addr %s944, 8
          %s946 = scalar_lea.vmem [#allocation11], %s945
          %948 = dma.done %s943, 128
        $region92: #{tpu_custom_call.1} parent=87 // pred_fallthru
          _
      $region88: #{tpu_custom_call.1} parent=5 // pred_fallthru
        _
    $region6: #{tpu_custom_call.1} parent=1 // loop_footer
      %s26 = sadd.s32 1, %s22
    $region7: #{tpu_custom_call.1} parent=1 // loop_footer_branch
      %21 = sbr.rel target = $region3
    $region8: #{tpu_custom_call.1} parent=1 // loop_exit
      _
    %949 = vsyncpa [#allocation3], 1
    %s950 = scalar_lea.sflag [#allocation3], 1
    %951 = vsyncpa %s950, 1
    %952 = vsyncpa [#allocation6], 1
    %953 = vsyncpa [#allocation9], 1
    %954 = vsyncpa [#allocation4], 1
    %s955 = scalar_lea.sflag [#allocation4], 1
    %956 = vsyncpa %s955, 1

</llo_original>
